<compile_context>
chip_gen: v5e
topology: v5e:2x2
jax: 0.10.0
libtpu: 0.0.40
codegen_flags: <defaults>
</compile_context>

<pallas_src>
import functools

import jax
import jax.numpy as jnp
from jax.experimental import pallas as pl
from jax.experimental.pallas import tpu as pltpu


_VMEM_LIMIT = 32 * 1024 * 1024   # explicit scoped-VMEM cap; safe on v5e/v6e/v7x


def _round_up(a, b):
    return (a + b - 1) // b * b


def _pick_tile(padded, candidates):
    """Largest candidate tile that evenly divides the padded extent."""
    for t in candidates:
        if padded % t == 0:
            return t
    return candidates[-1]


# ---------------- kernel 1: squeeze (global average pool) -----------------

def _squeeze_kernel(x_ref, mean_ref, acc_ref, *, inv_hw):
    j = pl.program_id(1)

    @pl.when(j == 0)
    def _():
        acc_ref[...] = jnp.zeros_like(acc_ref)

    # Accumulate the spatial sum in f32 (cross-lane reduce -> XLU slot).
    acc_ref[...] += jnp.sum(x_ref[...].astype(jnp.float32), axis=1, keepdims=True)

    @pl.when(j == pl.num_programs(1) - 1)
    def _():
        mean_ref[...] = acc_ref[...] * inv_hw


# ---------------- kernel 2: excitation (fc1 -> relu -> fc2 -> sigmoid) ----

def _excite_kernel(s_ref, w1_ref, b1_ref, w2_ref, b2_ref, g_ref):
    s = s_ref[...].astype(jnp.float32)                                  # (B, C)
    h = jnp.dot(s, w1_ref[...], preferred_element_type=jnp.float32) + b1_ref[...]
    h = jnp.maximum(h, 0.0)                                             # (B, Cr)
    z = jnp.dot(h, w2_ref[...], preferred_element_type=jnp.float32) + b2_ref[...]
    g_ref[...] = jax.nn.sigmoid(z)                                      # (B, C)


# ---------------- kernel 3: scale (per-row broadcast multiply) ------------

def _scale_kernel(x_ref, g_ref, o_ref):
    x = x_ref[...]                                   # stay in the input dtype
    o_ref[...] = (x * g_ref[...].astype(x.dtype)).astype(o_ref.dtype)


def channel_se_layer(x, w1, b1, w2, b2):
    """x: (B, C, H, W).  w1: (Cr, C), b1: (Cr,), w2: (C, Cr), b2: (C,)
    (same parameter shapes/convention as torch.nn.Linear)."""
    B, C, H, W = x.shape
    Cr = w1.shape[0]
    R, HW = B * C, H * W

    R_pad = _round_up(R, 8)
    HW_pad = _round_up(HW, 128)
    tr = _pick_tile(R_pad, (256, 128, 64, 32, 16, 8))
    thw = _pick_tile(HW_pad, (2048, 1024, 512, 256, 128))
    n_r, n_hw = R_pad // tr, HW_pad // thw

    # Lane-dense 2-D view: rows = (batch, channel), lanes = spatial.
    x2 = x.reshape(R, HW)
    if (R_pad, HW_pad) != (R, HW):
        # TODO(synk): zero-pad costs one extra HBM round-trip; only taken for
        # awkward shapes (R not a multiple of 8 / HW not a multiple of 128).
        x2 = jnp.pad(x2, ((0, R_pad - R), (0, HW_pad - HW)))

    # ---- pass 1: squeeze (gridded reduction, reduction axis last) ----
    mean = pl.pallas_call(
        functools.partial(_squeeze_kernel, inv_hw=1.0 / HW),
        out_shape=jax.ShapeDtypeStruct((R_pad, 1), jnp.float32),
        grid=(n_r, n_hw),
        in_specs=[pl.BlockSpec((tr, thw), lambda i, j: (i, j))],
        out_specs=pl.BlockSpec((tr, 1), lambda i, j: (i, 0)),
        scratch_shapes=[pltpu.VMEM((tr, 1), jnp.float32)],
        compiler_params=pltpu.CompilerParams(
            dimension_semantics=("parallel", "arbitrary"),
            vmem_limit_bytes=_VMEM_LIMIT),
    )(x2)

    # ---- excitation (tiny; single ungridded call, weights DMA once) ----
    squeeze = mean[:R].reshape(B, C)
    w1t = jnp.asarray(w1, jnp.float32).T           # (C, Cr)
    w2t = jnp.asarray(w2, jnp.float32).T           # (Cr, C)
    b1r = jnp.asarray(b1, jnp.float32).reshape(1, Cr)
    b2r = jnp.asarray(b2, jnp.float32).reshape(1, C)

    gate = pl.pallas_call(
        _excite_kernel,
        out_shape=jax.ShapeDtypeStruct((B, C), jnp.float32),
        in_specs=[
            pl.BlockSpec((B, C), lambda: (0, 0)),
            pl.BlockSpec((C, Cr), lambda: (0, 0)),
            pl.BlockSpec((1, Cr), lambda: (0, 0)),
            pl.BlockSpec((Cr, C), lambda: (0, 0)),
            pl.BlockSpec((1, C), lambda: (0, 0)),
        ],
        out_specs=pl.BlockSpec((B, C), lambda: (0, 0)),
        compiler_params=pltpu.CompilerParams(vmem_limit_bytes=_VMEM_LIMIT),
    )(squeeze, w1t, b1r, w2t, b2r)

    # ---- pass 2: scale (gridded, pipelined, both axes parallel) ----
    gate_rows = gate.reshape(R, 1)
    if R_pad != R:
        gate_rows = jnp.pad(gate_rows, ((0, R_pad - R), (0, 0)))

    out2 = pl.pallas_call(
        _scale_kernel,
        out_shape=jax.ShapeDtypeStruct((R_pad, HW_pad), x.dtype),
        grid=(n_r, n_hw),
        in_specs=[
            pl.BlockSpec((tr, thw), lambda i, j: (i, j)),
            pl.BlockSpec((tr, 1), lambda i, j: (i, 0)),
        ],
        out_specs=pl.BlockSpec((tr, thw), lambda i, j: (i, j)),
        compiler_params=pltpu.CompilerParams(
            dimension_semantics=("parallel", "parallel"),
            vmem_limit_bytes=_VMEM_LIMIT),
    )(x2, gate_rows)

    return out2[:R, :HW].reshape(B, C, H, W)


def _reference(x, w1, b1, w2, b2):
    """Pure-JAX reference mirroring the PyTorch forward."""
    B, C, H, W = x.shape
    sq = x.reshape(B, C, -1).mean(axis=2)
    h = jnp.maximum(sq @ w1.T + b1, 0.0)
    s = jax.nn.sigmoid(h @ w2.T + b2)
    return x * s.reshape(B, C, 1, 1)


if __name__ == "__main__":
    B, C, H, W = 2, 4, 16, 16
    reduction_ratio = 2
    Cr = C // reduction_ratio

    key = jax.random.PRNGKey(0)
    kx, k1, k2, k3, k4 = jax.random.split(key, 5)

    x = jax.random.normal(kx, (B, C, H, W), dtype=jnp.float32)

    # Deterministic parameter init (same shapes as nn.Linear; uniform like torch).
    bound1 = 1.0 / jnp.sqrt(C)
    w1 = jax.random.uniform(k1, (Cr, C), minval=-bound1, maxval=bound1, dtype=jnp.float32)
    b1 = jax.random.uniform(k2, (Cr,), minval=-bound1, maxval=bound1, dtype=jnp.float32)
    bound2 = 1.0 / jnp.sqrt(Cr)
    w2 = jax.random.uniform(k3, (C, Cr), minval=-bound2, maxval=bound2, dtype=jnp.float32)
    b2 = jax.random.uniform(k4, (C,), minval=-bound2, maxval=bound2, dtype=jnp.float32)

    se = jax.jit(channel_se_layer)
    out = se(x, w1, b1, w2, b2)
    out = jax.block_until_ready(out)

    ref = _reference(x, w1, b1, w2, b2)
    assert out.shape == (B, C, H, W)
    assert jnp.allclose(out, ref, atol=1e-5, rtol=1e-5)

    print("KERNEL_OK")
</pallas_src>

<mosaic_0001>
module attributes {stable_mosaic.version = 11 : i64} {
  func.func @_squeeze_kernel(%arg0: i32, %arg1: i32, %arg2: memref<8x256xf32, #tpu.memory_space<vmem>>, %arg3: memref<8x1xf32, #tpu.memory_space<vmem>>, %arg4: memref<8x1xf32, #tpu.memory_space<vmem>>) attributes {dimension_semantics = [#tpu.dimension_semantics<parallel>, #tpu.dimension_semantics<arbitrary>], iteration_bounds = array<i64: 1, 1>, scalar_prefetch = 0 : i64, scratch_operands = 1 : i64, tpu.core_type = #tpu.core_type<tc>, window_params = [{transform_indices = @transform_0, window_bounds = array<i64: 8, 256>}, {transform_indices = @transform_1, window_bounds = array<i64: 8, 1>}]} {
    %c0_i32 = arith.constant 0 : i32
    %0 = arith.cmpi eq, %arg1, %c0_i32 : i32
    %1 = arith.extui %0 : i1 to i32
    %c0_i32_0 = arith.constant 0 : i32
    %2 = arith.cmpi ne, %1, %c0_i32_0 : i32
    scf.if %2 {
      %cst_8 = arith.constant 0.000000e+00 : f32
      %12 = vector.broadcast %cst_8 : f32 to vector<8x1xf32>
      %c0_9 = arith.constant 0 : index
      %c0_10 = arith.constant 0 : index
      %13 = vector.load %arg4[%c0_9, %c0_10] : memref<8x1xf32, #tpu.memory_space<vmem>>, vector<8x1xf32>
      tpu.vector_store %arg4[%c0_9, %c0_10], %12 {strides = array<i32>} : memref<8x1xf32, #tpu.memory_space<vmem>>, vector<8x1xf32>,
    } else {
    }
    %c0 = arith.constant 0 : index
    %c0_1 = arith.constant 0 : index
    %3 = vector.load %arg4[%c0, %c0_1] : memref<8x1xf32, #tpu.memory_space<vmem>>, vector<8x1xf32>
    %c0_2 = arith.constant 0 : index
    %c0_3 = arith.constant 0 : index
    %4 = vector.load %arg2[%c0_2, %c0_3] : memref<8x256xf32, #tpu.memory_space<vmem>>, vector<8x256xf32>
    %cst = arith.constant dense<0.000000e+00> : vector<8xf32>
    %5 = vector.multi_reduction <add>, %4, %cst [1] : vector<8x256xf32> to vector<8xf32>
    %6 = vector.shape_cast %5 : vector<8xf32> to vector<8x1xf32>
    %7 = arith.addf %3, %6 : vector<8x1xf32>
    %c0_4 = arith.constant 0 : index
    %c0_5 = arith.constant 0 : index
    %8 = vector.load %arg4[%c0_4, %c0_5] : memref<8x1xf32, #tpu.memory_space<vmem>>, vector<8x1xf32>
    tpu.vector_store %arg4[%c0_4, %c0_5], %7 {strides = array<i32>} : memref<8x1xf32, #tpu.memory_space<vmem>>, vector<8x1xf32>,
    %c0_i32_6 = arith.constant 0 : i32
    %9 = arith.cmpi eq, %arg1, %c0_i32_6 : i32
    %10 = arith.extui %9 : i1 to i32
    %c0_i32_7 = arith.constant 0 : i32
    %11 = arith.cmpi ne, %10, %c0_i32_7 : i32
    scf.if %11 {
      %c0_8 = arith.constant 0 : index
      %c0_9 = arith.constant 0 : index
      %12 = vector.load %arg4[%c0_8, %c0_9] : memref<8x1xf32, #tpu.memory_space<vmem>>, vector<8x1xf32>
      %cst_10 = arith.constant 3.906250e-03 : f32
      %13 = vector.broadcast %cst_10 : f32 to vector<8x1xf32>
      %14 = arith.mulf %12, %13 : vector<8x1xf32>
      %c0_11 = arith.constant 0 : index
      %c0_12 = arith.constant 0 : index
      %15 = vector.load %arg3[%c0_11, %c0_12] : memref<8x1xf32, #tpu.memory_space<vmem>>, vector<8x1xf32>
      tpu.vector_store %arg3[%c0_11, %c0_12], %14 {strides = array<i32>} : memref<8x1xf32, #tpu.memory_space<vmem>>, vector<8x1xf32>,
    } else {
    }
    return
  }
  func.func @transform_0(%arg0: i32, %arg1: i32) -> (i32, i32) {
    %c0_i32 = arith.constant 0 : i32
    return %arg0, %arg1 : i32, i32
  }
  func.func @transform_1(%arg0: i32, %arg1: i32) -> (i32, i32) {
    %c0_i32 = arith.constant 0 : i32
    %c0_i32_0 = arith.constant 0 : i32
    return %arg0, %c0_i32 : i32, i32
  }
}

module attributes {stable_mosaic.version = 11 : i64} {
  func.func @_excite_kernel(%arg0: memref<2x4xf32, #tpu.memory_space<vmem>>, %arg1: memref<4x2xf32, #tpu.memory_space<vmem>>, %arg2: memref<1x2xf32, #tpu.memory_space<vmem>>, %arg3: memref<2x4xf32, #tpu.memory_space<vmem>>, %arg4: memref<1x4xf32, #tpu.memory_space<vmem>>, %arg5: memref<2x4xf32, #tpu.memory_space<vmem>>) attributes {dimension_semantics = [], scalar_prefetch = 0 : i64, scratch_operands = 0 : i64, tpu.core_type = #tpu.core_type<tc>} {
    %c0 = arith.constant 0 : index
    %c0_0 = arith.constant 0 : index
    %0 = vector.load %arg0[%c0, %c0_0] : memref<2x4xf32, #tpu.memory_space<vmem>>, vector<2x4xf32>
    %c0_1 = arith.constant 0 : index
    %c0_2 = arith.constant 0 : index
    %1 = vector.load %arg1[%c0_1, %c0_2] : memref<4x2xf32, #tpu.memory_space<vmem>>, vector<4x2xf32>
    %cst = arith.constant dense<0.000000e+00> : vector<2x2xf32>
    %2 = tpu.matmul %0, %1, %cst {dimension_numbers = #tpu.dot_dimension_numbers<[1], [0], [0], [1], [0, 0, 1, 1], [], []>} : vector<2x4xf32>, vector<4x2xf32>, vector<2x2xf32> -> vector<2x2xf32>
    %c0_3 = arith.constant 0 : index
    %c0_4 = arith.constant 0 : index
    %3 = vector.load %arg2[%c0_3, %c0_4] : memref<1x2xf32, #tpu.memory_space<vmem>>, vector<1x2xf32>
    %4 = vector.broadcast %3 : vector<1x2xf32> to vector<2x2xf32>
    %5 = arith.addf %2, %4 : vector<2x2xf32>
    %cst_5 = arith.constant 0.000000e+00 : f32
    %6 = vector.broadcast %cst_5 : f32 to vector<2x2xf32>
    %7 = arith.maximumf %5, %6 : vector<2x2xf32>
    %c0_6 = arith.constant 0 : index
    %c0_7 = arith.constant 0 : index
    %8 = vector.load %arg3[%c0_6, %c0_7] : memref<2x4xf32, #tpu.memory_space<vmem>>, vector<2x4xf32>
    %cst_8 = arith.constant dense<0.000000e+00> : vector<2x4xf32>
    %9 = tpu.matmul %7, %8, %cst_8 {dimension_numbers = #tpu.dot_dimension_numbers<[1], [0], [0], [1], [0, 0, 1, 1], [], []>} : vector<2x2xf32>, vector<2x4xf32>, vector<2x4xf32> -> vector<2x4xf32>
    %c0_9 = arith.constant 0 : index
    %c0_10 = arith.constant 0 : index
    %10 = vector.load %arg4[%c0_9, %c0_10] : memref<1x4xf32, #tpu.memory_space<vmem>>, vector<1x4xf32>
    %11 = vector.broadcast %10 : vector<1x4xf32> to vector<2x4xf32>
    %12 = arith.addf %9, %11 : vector<2x4xf32>
    %13 = arith.negf %12 : vector<2x4xf32>
    %14 = math.exp %13 : vector<2x4xf32>
    %cst_11 = arith.constant 1.000000e+00 : f32
    %15 = vector.broadcast %cst_11 : f32 to vector<2x4xf32>
    %16 = arith.addf %15, %14 : vector<2x4xf32>
    %17 = arith.divf %15, %16 : vector<2x4xf32>
    %c0_12 = arith.constant 0 : index
    %c0_13 = arith.constant 0 : index
    %18 = vector.load %arg5[%c0_12, %c0_13] : memref<2x4xf32, #tpu.memory_space<vmem>>, vector<2x4xf32>
    tpu.vector_store %arg5[%c0_12, %c0_13], %17 {strides = array<i32>} : memref<2x4xf32, #tpu.memory_space<vmem>>, vector<2x4xf32>,
    return
  }
}

module attributes {stable_mosaic.version = 11 : i64} {
  func.func @_scale_kernel(%arg0: i32, %arg1: i32, %arg2: memref<8x256xf32, #tpu.memory_space<vmem>>, %arg3: memref<8x1xf32, #tpu.memory_space<vmem>>, %arg4: memref<8x256xf32, #tpu.memory_space<vmem>>) attributes {dimension_semantics = [#tpu.dimension_semantics<parallel>, #tpu.dimension_semantics<parallel>], iteration_bounds = array<i64: 1, 1>, scalar_prefetch = 0 : i64, scratch_operands = 0 : i64, tpu.core_type = #tpu.core_type<tc>, window_params = [{transform_indices = @transform_0, window_bounds = array<i64: 8, 256>}, {transform_indices = @transform_1, window_bounds = array<i64: 8, 1>}, {transform_indices = @transform_2, window_bounds = array<i64: 8, 256>}]} {
    %c0 = arith.constant 0 : index
    %c0_0 = arith.constant 0 : index
    %0 = vector.load %arg2[%c0, %c0_0] : memref<8x256xf32, #tpu.memory_space<vmem>>, vector<8x256xf32>
    %c0_1 = arith.constant 0 : index
    %c0_2 = arith.constant 0 : index
    %1 = vector.load %arg3[%c0_1, %c0_2] : memref<8x1xf32, #tpu.memory_space<vmem>>, vector<8x1xf32>
    %2 = vector.broadcast %1 : vector<8x1xf32> to vector<8x256xf32>
    %3 = arith.mulf %0, %2 : vector<8x256xf32>
    %c0_3 = arith.constant 0 : index
    %c0_4 = arith.constant 0 : index
    %4 = vector.load %arg4[%c0_3, %c0_4] : memref<8x256xf32, #tpu.memory_space<vmem>>, vector<8x256xf32>
    tpu.vector_store %arg4[%c0_3, %c0_4], %3 {strides = array<i32>} : memref<8x256xf32, #tpu.memory_space<vmem>>, vector<8x256xf32>,
    return
  }
  func.func @transform_0(%arg0: i32, %arg1: i32) -> (i32, i32) {
    %c0_i32 = arith.constant 0 : i32
    return %arg0, %arg1 : i32, i32
  }
  func.func @transform_1(%arg0: i32, %arg1: i32) -> (i32, i32) {
    %c0_i32 = arith.constant 0 : i32
    %c0_i32_0 = arith.constant 0 : i32
    return %arg0, %c0_i32 : i32, i32
  }
  func.func @transform_2(%arg0: i32, %arg1: i32) -> (i32, i32) {
    %c0_i32 = arith.constant 0 : i32
    return %arg0, %arg1 : i32, i32
  }
}

</mosaic_0001>

<llo_original>
// kernel: channel_se_layer.3
$region0: #{channel_se_layer.3}
  #allocation0 [shape = 'u32[]', space=smem, size = 0x4, offset = 0x4, fixed_abs, tag = 'smem constant byte address 0x4 - core index']
  #allocation1 [shape = 'u32[72,128]{1,0:T(1,128)}', space=vmem, size = 0x9000, scoped, tag = 'internal scratch']
  #allocation2 [shape = 'f32[8,1]{1,0:T(8,128)}', space=vmem, size = 0x1000, scoped, tag = 'scratch operand']
  %s0 = inlined_call_operand.vmem [shape: f32[8,256], index: 0, kind: input, shape index: {}]
  %s1 = inlined_call_operand.vmem [shape: f32[8,1], index: 1, kind: output, shape index: {}]
  %s2 = sld [smem:[#allocation0]]
  $region22: #{channel_se_layer.3} parent=0
    _
  %s4 = ssub.s32 1, %s2
  %s5 = scalar_select 0, %s4, %s2
  // Predicated region
  $region2: #{channel_se_layer.3} parent=0 // pred_check
    _
  $region3: #{channel_se_layer.3} parent=0 // pred_check_branch
    %7 = sbr.rel (0) target = $region5
  $region4: #{channel_se_layer.3} parent=0 // pred_region
    _
  $region5: #{channel_se_layer.3} parent=0 // pred_fallthru
    _
  %p8 = scmp.eq.s32.totalorder 0, 0
  // Predicated region
  $region6: #{channel_se_layer.3} parent=0 // pred_check
    %p9 = pneg %p8
  $region7: #{channel_se_layer.3} parent=0 // pred_check_branch
    %11 = sbr.rel (%p9) target = $region9
  $region8: #{channel_se_layer.3} parent=0 // pred_region
    %vm12 = vcmask 7168
    %13 = vst.msk [vmem:[#allocation2] sm:$0xff] %vm12, 0.0
  $region9: #{channel_se_layer.3} parent=0 // pred_fallthru
    _
  %v14 = vld [vmem:[#allocation2] sm:$0xff]
  %v15 = vld [vmem:[%s0] sm:$0xff]
  %v16 = vld [vmem:[%s0 + $0x8] sm:$0xff]
  %v17 = vadd.f32 %v15, %v16
  %18 = vadd.xlane.f32.xlu0 %v17
  %v19 = vpop.xlane.xlu0 %18
  %v20 = vadd.f32 %v14, %v19
  %vm21 = vcmask 7168
  %22 = vst.msk [vmem:[#allocation2] sm:$0xff] %vm21, %v20
  // Predicated region
  $region10: #{channel_se_layer.3} parent=0 // pred_check
    %p23 = pneg %p8
  $region11: #{channel_se_layer.3} parent=0 // pred_check_branch
    %25 = sbr.rel (%p23) target = $region13
  $region12: #{channel_se_layer.3} parent=0 // pred_region
    %v26 = vld [vmem:[#allocation2] sm:$0xff]
    %v27 = vmul.f32 %v26, 0.00390625
    %28 = vst.msk [vmem:[%s1] sm:$0xff] %vm21, %v27
  $region13: #{channel_se_layer.3} parent=0 // pred_fallthru
    _
  // Predicated region
  $region14: #{channel_se_layer.3} parent=0 // pred_check
    _
  $region15: #{channel_se_layer.3} parent=0 // pred_check_branch
    %30 = sbr.rel (0) target = $region17
  $region16: #{channel_se_layer.3} parent=0 // pred_region
    _
  $region17: #{channel_se_layer.3} parent=0 // pred_fallthru
    _
  // Predicated region
  $region18: #{channel_se_layer.3} parent=0 // pred_check
    _
  $region19: #{channel_se_layer.3} parent=0 // pred_check_branch
    %32 = sbr.rel (0) target = $region21
  $region20: #{channel_se_layer.3} parent=0 // pred_region
    _
  $region21: #{channel_se_layer.3} parent=0 // pred_fallthru
    _

// kernel: channel_se_layer.5
$region0: #{channel_se_layer.5}
  #allocation0 [shape = 'u32[]', space=smem, size = 0x4, offset = 0x4, fixed_abs, tag = 'smem constant byte address 0x4 - core index']
  #allocation1 [shape = 'u32[72,128]{1,0:T(1,128)}', space=vmem, size = 0x9000, scoped, tag = 'internal scratch']
  %s0 = inlined_call_operand.vmem [shape: f32[8,256], index: 0, kind: input, shape index: {}]
  %s1 = inlined_call_operand.vmem [shape: f32[8,1], index: 1, kind: input, shape index: {}]
  %s2 = inlined_call_operand.vmem [shape: f32[8,256], index: 2, kind: output, shape index: {}]
  %s3 = sld [smem:[#allocation0]]
  $region18: #{channel_se_layer.5} parent=0
    _
  %s5 = ssub.s32 1, %s3
  %s6 = scalar_select 0, %s5, %s3
  // Predicated region
  $region2: #{channel_se_layer.5} parent=0 // pred_check
    _
  $region3: #{channel_se_layer.5} parent=0 // pred_check_branch
    %8 = sbr.rel (0) target = $region5
  $region4: #{channel_se_layer.5} parent=0 // pred_region
    _
  $region5: #{channel_se_layer.5} parent=0 // pred_fallthru
    _
  // Predicated region
  $region6: #{channel_se_layer.5} parent=0 // pred_check
    _
  $region7: #{channel_se_layer.5} parent=0 // pred_check_branch
    %10 = sbr.rel (0) target = $region9
  $region8: #{channel_se_layer.5} parent=0 // pred_region
    _
  $region9: #{channel_se_layer.5} parent=0 // pred_fallthru
    _
  %v11 = vld [vmem:[%s0] sm:$0xff]
  %v12 = vld [vmem:[%s0 + $0x8] sm:$0xff]
  %v13 = vld [vmem:[%s1] sm:$0xff]
  %15 = vset.pattern.permute.xlu0 0
  %16 = vperm.xlu0 %15, %v13
  %v17 = vpop.permute.xlu0 %16
  %v19 = vmul.f32 %v11, %v17
  %v20 = vmul.f32 %v12, %v17
  %21 = vst [vmem:[%s2] sm:$0xff] %v19
  %22 = vst [vmem:[%s2 + $0x8] sm:$0xff] %v20
  // Predicated region
  $region10: #{channel_se_layer.5} parent=0 // pred_check
    _
  $region11: #{channel_se_layer.5} parent=0 // pred_check_branch
    %24 = sbr.rel (0) target = $region13
  $region12: #{channel_se_layer.5} parent=0 // pred_region
    _
  $region13: #{channel_se_layer.5} parent=0 // pred_fallthru
    _
  // Predicated region
  $region14: #{channel_se_layer.5} parent=0 // pred_check
    _
  $region15: #{channel_se_layer.5} parent=0 // pred_check_branch
    %26 = sbr.rel (0) target = $region17
  $region16: #{channel_se_layer.5} parent=0 // pred_region
    _
  $region17: #{channel_se_layer.5} parent=0 // pred_fallthru
    _

// kernel: channel_se_layer.4
$region0: #{channel_se_layer.4}
  #allocation0 [shape = 'u32[]', space=smem, size = 0x4, offset = 0x4, fixed_abs, tag = 'smem constant byte address 0x4 - core index']
  #allocation1 [shape = 'u32[72,128]{1,0:T(1,128)}', space=vmem, size = 0x9000, scoped, tag = 'internal scratch']
  %s0 = inlined_call_operand.vmem [shape: f32[2,4], index: 0, kind: input, shape index: {}]
  %s1 = inlined_call_operand.vmem [shape: f32[4,2], index: 1, kind: input, shape index: {}]
  %s2 = inlined_call_operand.vmem [shape: f32[1,2], index: 2, kind: input, shape index: {}]
  %s3 = inlined_call_operand.vmem [shape: f32[2,4], index: 3, kind: input, shape index: {}]
  %s4 = inlined_call_operand.vmem [shape: f32[1,4], index: 4, kind: input, shape index: {}]
  %s5 = inlined_call_operand.vmem [shape: f32[2,4], index: 5, kind: output, shape index: {}]
  %s6 = sld [smem:[#allocation0]]
  $region30: #{channel_se_layer.4} parent=0
    _
  %s8 = ssub.s32 1, %s6
  %s9 = scalar_select 0, %s8, %s6
  // Predicated region
  $region2: #{channel_se_layer.4} parent=0 // pred_check
    _
  $region3: #{channel_se_layer.4} parent=0 // pred_check_branch
    %11 = sbr.rel (0) target = $region5
  $region4: #{channel_se_layer.4} parent=0 // pred_region
    _
  $region5: #{channel_se_layer.4} parent=0 // pred_fallthru
    _
  // Predicated region
  $region6: #{channel_se_layer.4} parent=0 // pred_check
    _
  $region7: #{channel_se_layer.4} parent=0 // pred_check_branch
    %13 = sbr.rel (0) target = $region9
  $region8: #{channel_se_layer.4} parent=0 // pred_region
    _
  $region9: #{channel_se_layer.4} parent=0 // pred_fallthru
    _
  // Predicated region
  $region10: #{channel_se_layer.4} parent=0 // pred_check
    _
  $region11: #{channel_se_layer.4} parent=0 // pred_check_branch
    %15 = sbr.rel (0) target = $region13
  $region12: #{channel_se_layer.4} parent=0 // pred_region
    _
  $region13: #{channel_se_layer.4} parent=0 // pred_fallthru
    _
  // Predicated region
  $region14: #{channel_se_layer.4} parent=0 // pred_check
    _
  $region15: #{channel_se_layer.4} parent=0 // pred_check_branch
    %17 = sbr.rel (0) target = $region17
  $region16: #{channel_se_layer.4} parent=0 // pred_region
    _
  $region17: #{channel_se_layer.4} parent=0 // pred_fallthru
    _
  // Predicated region
  $region18: #{channel_se_layer.4} parent=0 // pred_check
    _
  $region19: #{channel_se_layer.4} parent=0 // pred_check_branch
    %19 = sbr.rel (0) target = $region21
  $region20: #{channel_se_layer.4} parent=0 // pred_region
    _
  $region21: #{channel_se_layer.4} parent=0 // pred_fallthru
    _
  %v20 = vld [vmem:[%s0] sm:$0x3]
  %v21 = vld [vmem:[%s1] sm:$0xf]
  %v22 = vld [vmem:[%s2] sm:$0x1]
  %v24 = vperm.slane %v22, 0
  %vm26 = vcmask 31744
  %v28 = vsel %vm26, %v20, 0
  %vm30 = vcmask 1043456
  %v32 = vsel %vm30, %v21, 0
  %34 = vmatpush.msra.mxu0 0.0
  %35 = vmatpush.msra.mxu0 0.0
  %36 = vmatpush.msra.mxu0 0.0
  %37 = vmatpush.msra.mxu0 0.0
  %38 = vmatpush.msra.mxu0 0.0
  %39 = vmatpush.msra.mxu0 0.0
  %40 = vmatpush.msra.mxu0 0.0
  %41 = vmatpush.msra.mxu0 0.0
  %42 = vmatpush.msra.mxu0 0.0
  %43 = vmatpush.msra.mxu0 0.0
  %44 = vmatpush.msra.mxu0 0.0
  %45 = vmatpush.msra.mxu0 0.0
  %46 = vmatpush.msra.mxu0 0.0
  %47 = vmatpush.msra.mxu0 0.0
  %48 = vmatpush.msra.mxu0 0.0
  %49 = vmatpush.msra.mxu0 %v32
  %50 = vmatmul.f32.gmra.mxu0 %v28
  %v51 = vpop.f32.mrf.mxu0
  %v52 = vadd.f32 %v24, %v51
  %53 = vdwg.mxu0
  %v54 = vmax.f32 %v52, 0.0
  %v55 = vld [vmem:[%s3] sm:$0x3]
  %v56 = vld [vmem:[%s4] sm:$0x1]
  %v58 = vperm.slane %v56, 0
  %vm60 = vcmask 15360
  %v62 = vsel %vm60, %v54, 0
  %vm64 = vcmask 1041408
  %v66 = vsel %vm64, %v55, 0
  %68 = vmatpush.msra.mxu0 0.0
  %69 = vmatpush.msra.mxu0 0.0
  %70 = vmatpush.msra.mxu0 0.0
  %71 = vmatpush.msra.mxu0 0.0
  %72 = vmatpush.msra.mxu0 0.0
  %73 = vmatpush.msra.mxu0 0.0
  %74 = vmatpush.msra.mxu0 0.0
  %75 = vmatpush.msra.mxu0 0.0
  %76 = vmatpush.msra.mxu0 0.0
  %77 = vmatpush.msra.mxu0 0.0
  %78 = vmatpush.msra.mxu0 0.0
  %79 = vmatpush.msra.mxu0 0.0
  %80 = vmatpush.msra.mxu0 0.0
  %81 = vmatpush.msra.mxu0 0.0
  %82 = vmatpush.msra.mxu0 0.0
  %83 = vmatpush.msra.mxu0 %v66
  %84 = vmatmul.f32.gmra.mxu0 %v62
  %v85 = vpop.f32.mrf.mxu0
  %v86 = vadd.f32 %v58, %v85
  %87 = vdwg.mxu0
  %v88 = vxor.u32 %v86, 2147483648
  %v89 = vmul.f32 %v88, 1.442695
  %v90 = vpow.pop %v89
  %v91 = vadd.f32 %v90, 1.0
  %v92 = vrcp.pop %v91
  %v93 = vmul.f32 %v91, %v92
  %v94 = vsub.f32 1.0, %v93
  %v95 = vmul.f32 %v92, %v94
  %v96 = vadd.f32 %v92, %v95
  %vm97 = vweird.f32 %v91
  %vm98 = vweird.f32 %v92
  %vm99 = vmor %vm97, %vm98
  %v100 = vsel %vm99, %v92, %v96
  %v101 = vand.u32 2147483647, %v91
  %vm102 = vcmp.eq.f32.partialorder %v101, 8.507059e+37
  %v103 = vand.u32 %v91, 2147483648
  %v104 = vor.u32 1.1754944e-38, %v103
  %v105 = vsel %vm102, %v104, %v100
  %v106 = vmul.f32 1.0, %v105
  %vm107 = vcmask 25600
  %108 = vst.msk [vmem:[%s5] sm:$0x3] %vm107, %v106
  // Predicated region
  $region22: #{channel_se_layer.4} parent=0 // pred_check
    _
  $region23: #{channel_se_layer.4} parent=0 // pred_check_branch
    %110 = sbr.rel (0) target = $region25
  $region24: #{channel_se_layer.4} parent=0 // pred_region
    _
  $region25: #{channel_se_layer.4} parent=0 // pred_fallthru
    _
  // Predicated region
  $region26: #{channel_se_layer.4} parent=0 // pred_check
    _
  $region27: #{channel_se_layer.4} parent=0 // pred_check_branch
    %112 = sbr.rel (0) target = $region29
  $region28: #{channel_se_layer.4} parent=0 // pred_region
    _
  $region29: #{channel_se_layer.4} parent=0 // pred_fallthru
    _

</llo_original>
